<compile_context>
chip_gen: v6e
topology: v6e:2x2x1
jax: 0.10.0
libtpu: 0.0.40
codegen_flags: <defaults>
</compile_context>

<pallas_src>
import functools
import math

import jax
import jax.numpy as jnp
from jax.experimental import pallas as pl
from jax.experimental.pallas import tpu as pltpu


def _round_up(x, m):
    return (x + m - 1) // m * m


def _pick_tile(desired, total, unit=128):
    """Largest multiple of `unit` that divides `total` and is <= max(desired, unit)."""
    assert total % unit == 0
    n_units = total // unit
    d = max(1, min(desired // unit, n_units))
    while n_units % d != 0:
        d -= 1
    return d * unit


# --------------------------------------------------------------------------- #
# Kernel 1: support = X @ W   (row-tiled, bf16 inputs, f32 MXU accumulation)
# --------------------------------------------------------------------------- #
def _support_kernel(x_ref, w_ref, o_ref):
    o_ref[...] = jnp.dot(
        x_ref[...], w_ref[...], preferred_element_type=jnp.float32
    ).astype(o_ref.dtype)


# --------------------------------------------------------------------------- #
# Kernel 2: out = adj @ support (+ bias)
#   - adj streamed as f32, cast to bf16 per-tile on the VPU (no separate pass)
#   - accumulate directly into the f32 output block (resident across k)
# --------------------------------------------------------------------------- #
def _adj_matmul_bias_kernel(adj_ref, s_ref, b_ref, o_ref):
    k = pl.program_id(1)
    partial = jnp.dot(
        adj_ref[...].astype(jnp.bfloat16),
        s_ref[...],
        preferred_element_type=jnp.float32,
    )

    @pl.when(k == 0)
    def _():
        o_ref[...] = partial

    @pl.when(k > 0)
    def _():
        o_ref[...] += partial

    @pl.when(k == pl.num_programs(1) - 1)
    def _():
        o_ref[...] += b_ref[...]   # (1, F_out_p) broadcast over rows, f32


def _adj_matmul_kernel(adj_ref, s_ref, o_ref):
    k = pl.program_id(1)
    partial = jnp.dot(
        adj_ref[...].astype(jnp.bfloat16),
        s_ref[...],
        preferred_element_type=jnp.float32,
    )

    @pl.when(k == 0)
    def _():
        o_ref[...] = partial

    @pl.when(k > 0)
    def _():
        o_ref[...] += partial


# --------------------------------------------------------------------------- #
# Wrapper
# --------------------------------------------------------------------------- #
@functools.partial(jax.jit, static_argnames=("tile_m", "tile_k"))
def graph_convolution(x, adj, weight, bias=None, *, tile_m=512, tile_k=2048):
    """Pallas implementation of GraphConvolution.forward.

    x:      (N, F_in)  float32
    adj:    (N, N)     float32 (dense representation of the sparse adjacency)
    weight: (F_in, F_out)
    bias:   (F_out,) or None
    returns (N, F_out) float32
    """
    N, F_in = x.shape
    F_out = weight.shape[1]

    # Minimal lane-dense padding (never to tile size — waste stays <1-2%).
    Np = _round_up(N, 128)
    F_in_p = _round_up(F_in, 128)
    F_out_p = _round_up(F_out, 128)

    # Tiles must divide Np exactly.
    tm = _pick_tile(tile_m, Np)     # kernel-2 row tile
    tk = _pick_tile(tile_k, Np)     # kernel-2 contraction tile
    tm1 = _pick_tile(256, Np)       # kernel-1 row tile (X@W is the small stage)

    # Small operands: pad/cast once (cheap relative to the N^2 adj stream).
    x_p = jnp.pad(x, ((0, Np - N), (0, F_in_p - F_in))).astype(jnp.bfloat16)
    w_p = jnp.pad(weight, ((0, F_in_p - F_in), (0, F_out_p - F_out))).astype(
        jnp.bfloat16
    )

    # adj: keep f32, no cast pass; pad only if N isn't a multiple of 128.
    adj_p = adj.astype(jnp.float32)
    if Np != N:
        adj_p = jnp.pad(adj_p, ((0, Np - N), (0, Np - N)))

    vmem_limit = 48 * 1024 * 1024   # fits v7x's 64 MiB VMEM with headroom

    # ---- support = X @ W  (computed exactly once) -------------------------- #
    support = pl.pallas_call(
        _support_kernel,
        out_shape=jax.ShapeDtypeStruct((Np, F_out_p), jnp.bfloat16),
        grid_spec=pltpu.PrefetchScalarGridSpec(
            num_scalar_prefetch=0,
            grid=(Np // tm1,),
            in_specs=[
                pl.BlockSpec((tm1, F_in_p), lambda i: (i, 0)),
                pl.BlockSpec((F_in_p, F_out_p), lambda i: (0, 0)),
            ],
            out_specs=pl.BlockSpec((tm1, F_out_p), lambda i: (i, 0)),
        ),
        compiler_params=pltpu.CompilerParams(
            dimension_semantics=("parallel",),
            vmem_limit_bytes=vmem_limit,
        ),
    )(x_p, w_p)

    # ---- out = adj @ support (+ bias)  (row-parallel, K-tiled contraction) - #
    grid = (Np // tm, Np // tk)
    adj_spec = pl.BlockSpec((tm, tk), lambda i, k: (i, k))
    sup_spec = pl.BlockSpec((tk, F_out_p), lambda i, k: (k, 0))
    out_spec = pl.BlockSpec((tm, F_out_p), lambda i, k: (i, 0))
    cparams = pltpu.CompilerParams(
        dimension_semantics=("parallel", "arbitrary"),
        vmem_limit_bytes=vmem_limit,
    )
    out_shape = jax.ShapeDtypeStruct((Np, F_out_p), jnp.float32)

    if bias is not None:
        b_p = jnp.pad(bias.astype(jnp.float32), (0, F_out_p - F_out)).reshape(
            1, F_out_p
        )
        out_p = pl.pallas_call(
            _adj_matmul_bias_kernel,
            out_shape=out_shape,
            grid_spec=pltpu.PrefetchScalarGridSpec(
                num_scalar_prefetch=0,
                grid=grid,
                in_specs=[
                    adj_spec,
                    sup_spec,
                    pl.BlockSpec((1, F_out_p), lambda i, k: (0, 0)),
                ],
                out_specs=out_spec,
            ),
            compiler_params=cparams,
        )(adj_p, support, b_p)
    else:
        out_p = pl.pallas_call(
            _adj_matmul_kernel,
            out_shape=out_shape,
            grid_spec=pltpu.PrefetchScalarGridSpec(
                num_scalar_prefetch=0,
                grid=grid,
                in_specs=[adj_spec, sup_spec],
                out_specs=out_spec,
            ),
            compiler_params=cparams,
        )(adj_p, support)

    # Strip padding.
    return out_p[:N, :F_out]


def init_gcn_params(key, in_features, out_features, bias=True):
    """Deterministic replica of GraphConvolution.reset_parameters()."""
    stdv = 1.0 / math.sqrt(out_features)
    kw, kb = jax.random.split(key)
    weight = jax.random.uniform(
        kw, (in_features, out_features), minval=-stdv, maxval=stdv, dtype=jnp.float32
    )
    b = (
        jax.random.uniform(
            kb, (out_features,), minval=-stdv, maxval=stdv, dtype=jnp.float32
        )
        if bias
        else None
    )
    return weight, b


if __name__ == "__main__":
    key = jax.random.PRNGKey(0)
    k_x, k_adj, k_p = jax.random.split(key, 3)

    N = 256            # number of graph nodes (small demo)
    in_features = 64   # padded to 128 internally
    out_features = 32  # padded to 128 lanes internally

    x = jax.random.normal(k_x, (N, in_features), dtype=jnp.float32)

    # Deterministic, symmetric, row-normalized "sparse" adjacency, dense here
    # (torch.spmm is numerically a dense matmul).
    raw = jax.random.uniform(k_adj, (N, N), dtype=jnp.float32)
    mask = (raw > 0.9).astype(jnp.float32)
    adj = mask + mask.T + jnp.eye(N, dtype=jnp.float32)
    adj = adj / jnp.maximum(adj.sum(axis=1, keepdims=True), 1.0)

    weight, bias = init_gcn_params(k_p, in_features, out_features, bias=True)

    out = graph_convolution(x, adj, weight, bias)
    out = jax.block_until_ready(out)

    # Pure-JAX f32 reference (kernel uses bf16 MXU inputs -> relaxed tolerance).
    ref = adj @ (x @ weight) + bias
    assert out.shape == (N, out_features)
    assert jnp.allclose(out, ref, atol=5e-2, rtol=5e-2), "mismatch vs reference"

    # Also exercise the bias=None path once.
    out_nb = jax.block_until_ready(graph_convolution(x, adj, weight, None))
    ref_nb = adj @ (x @ weight)
    assert jnp.allclose(out_nb, ref_nb, atol=5e-2, rtol=5e-2), "mismatch (no bias)"

    print("KERNEL_OK")
</pallas_src>

<mosaic_0001>
module attributes {stable_mosaic.version = 11 : i64} {
  func.func @_support_kernel(%arg0: i32, %arg1: memref<256x128xbf16, #tpu.memory_space<vmem>>, %arg2: memref<128x128xbf16, #tpu.memory_space<vmem>>, %arg3: memref<256x128xbf16, #tpu.memory_space<vmem>>) attributes {dimension_semantics = [#tpu.dimension_semantics<parallel>], iteration_bounds = array<i64: 1>, scalar_prefetch = 0 : i64, scratch_operands = 0 : i64, tpu.core_type = #tpu.core_type<tc>, window_params = [{transform_indices = @transform_0, window_bounds = array<i64: 256, 128>}, {pipeline_mode = #tpu.pipeline_mode<synchronous>, transform_indices = @transform_1, window_bounds = array<i64: 128, 128>}, {transform_indices = @transform_2, window_bounds = array<i64: 256, 128>}]} {
    %c0 = arith.constant 0 : index
    %c0_0 = arith.constant 0 : index
    %0 = vector.load %arg1[%c0, %c0_0] : memref<256x128xbf16, #tpu.memory_space<vmem>>, vector<256x128xbf16>
    %c0_1 = arith.constant 0 : index
    %c0_2 = arith.constant 0 : index
    %1 = vector.load %arg2[%c0_1, %c0_2] : memref<128x128xbf16, #tpu.memory_space<vmem>>, vector<128x128xbf16>
    %cst = arith.constant dense<0.000000e+00> : vector<256x128xf32>
    %2 = tpu.matmul %0, %1, %cst {dimension_numbers = #tpu.dot_dimension_numbers<[1], [0], [0], [1], [0, 0, 1, 1], [], []>} : vector<256x128xbf16>, vector<128x128xbf16>, vector<256x128xf32> -> vector<256x128xf32>
    %3 = arith.truncf %2 : vector<256x128xf32> to vector<256x128xbf16>
    %c0_3 = arith.constant 0 : index
    %c0_4 = arith.constant 0 : index
    %4 = vector.load %arg3[%c0_3, %c0_4] : memref<256x128xbf16, #tpu.memory_space<vmem>>, vector<256x128xbf16>
    tpu.vector_store %arg3[%c0_3, %c0_4], %3 {strides = array<i32>} : memref<256x128xbf16, #tpu.memory_space<vmem>>, vector<256x128xbf16>,
    return
  }
  func.func @transform_0(%arg0: i32) -> (i32, i32) {
    %c0_i32 = arith.constant 0 : i32
    %c0_i32_0 = arith.constant 0 : i32
    return %arg0, %c0_i32 : i32, i32
  }
  func.func @transform_1(%arg0: i32) -> (i32, i32) {
    %c0_i32 = arith.constant 0 : i32
    %c0_i32_0 = arith.constant 0 : i32
    %c0_i32_1 = arith.constant 0 : i32
    return %c0_i32, %c0_i32_0 : i32, i32
  }
  func.func @transform_2(%arg0: i32) -> (i32, i32) {
    %c0_i32 = arith.constant 0 : i32
    %c0_i32_0 = arith.constant 0 : i32
    return %arg0, %c0_i32 : i32, i32
  }
}

module attributes {stable_mosaic.version = 11 : i64} {
  func.func @_adj_matmul_bias_kernel(%arg0: i32, %arg1: i32, %arg2: memref<256x256xf32, #tpu.memory_space<vmem>>, %arg3: memref<256x128xbf16, #tpu.memory_space<vmem>>, %arg4: memref<1x128xf32, #tpu.memory_space<vmem>>, %arg5: memref<256x128xf32, #tpu.memory_space<vmem>>) attributes {dimension_semantics = [#tpu.dimension_semantics<parallel>, #tpu.dimension_semantics<arbitrary>], iteration_bounds = array<i64: 1, 1>, scalar_prefetch = 0 : i64, scratch_operands = 0 : i64, tpu.core_type = #tpu.core_type<tc>, window_params = [{transform_indices = @transform_0, window_bounds = array<i64: 256, 256>}, {transform_indices = @transform_1, window_bounds = array<i64: 256, 128>}, {pipeline_mode = #tpu.pipeline_mode<synchronous>, transform_indices = @transform_2, window_bounds = array<i64: 1, 128>}, {transform_indices = @transform_3, window_bounds = array<i64: 256, 128>}]} {
    %c0 = arith.constant 0 : index
    %c0_0 = arith.constant 0 : index
    %0 = vector.load %arg2[%c0, %c0_0] : memref<256x256xf32, #tpu.memory_space<vmem>>, vector<256x256xf32>
    %1 = arith.truncf %0 : vector<256x256xf32> to vector<256x256xbf16>
    %c0_1 = arith.constant 0 : index
    %c0_2 = arith.constant 0 : index
    %2 = vector.load %arg3[%c0_1, %c0_2] : memref<256x128xbf16, #tpu.memory_space<vmem>>, vector<256x128xbf16>
    %cst = arith.constant dense<0.000000e+00> : vector<256x128xf32>
    %3 = tpu.matmul %1, %2, %cst {dimension_numbers = #tpu.dot_dimension_numbers<[1], [0], [0], [1], [0, 0, 1, 1], [], []>} : vector<256x256xbf16>, vector<256x128xbf16>, vector<256x128xf32> -> vector<256x128xf32>
    %c0_i32 = arith.constant 0 : i32
    %4 = arith.cmpi eq, %arg1, %c0_i32 : i32
    %5 = arith.extui %4 : i1 to i32
    %c0_i32_3 = arith.constant 0 : i32
    %6 = arith.cmpi ne, %5, %c0_i32_3 : i32
    scf.if %6 {
      %c0_8 = arith.constant 0 : index
      %c0_9 = arith.constant 0 : index
      %13 = vector.load %arg5[%c0_8, %c0_9] : memref<256x128xf32, #tpu.memory_space<vmem>>, vector<256x128xf32>
      tpu.vector_store %arg5[%c0_8, %c0_9], %3 {strides = array<i32>} : memref<256x128xf32, #tpu.memory_space<vmem>>, vector<256x128xf32>,
    } else {
    }
    %c0_i32_4 = arith.constant 0 : i32
    %7 = arith.cmpi sgt, %arg1, %c0_i32_4 : i32
    %8 = arith.extui %7 : i1 to i32
    %c0_i32_5 = arith.constant 0 : i32
    %9 = arith.cmpi ne, %8, %c0_i32_5 : i32
    scf.if %9 {
      %c0_8 = arith.constant 0 : index
      %c0_9 = arith.constant 0 : index
      %13 = vector.load %arg5[%c0_8, %c0_9] : memref<256x128xf32, #tpu.memory_space<vmem>>, vector<256x128xf32>
      %14 = arith.addf %13, %3 : vector<256x128xf32>
      %c0_10 = arith.constant 0 : index
      %c0_11 = arith.constant 0 : index
      %15 = vector.load %arg5[%c0_10, %c0_11] : memref<256x128xf32, #tpu.memory_space<vmem>>, vector<256x128xf32>
      tpu.vector_store %arg5[%c0_10, %c0_11], %14 {strides = array<i32>} : memref<256x128xf32, #tpu.memory_space<vmem>>, vector<256x128xf32>,
    } else {
    }
    %c0_i32_6 = arith.constant 0 : i32
    %10 = arith.cmpi eq, %arg1, %c0_i32_6 : i32
    %11 = arith.extui %10 : i1 to i32
    %c0_i32_7 = arith.constant 0 : i32
    %12 = arith.cmpi ne, %11, %c0_i32_7 : i32
    scf.if %12 {
      %c0_8 = arith.constant 0 : index
      %c0_9 = arith.constant 0 : index
      %13 = vector.load %arg5[%c0_8, %c0_9] : memref<256x128xf32, #tpu.memory_space<vmem>>, vector<256x128xf32>
      %c0_10 = arith.constant 0 : index
      %c0_11 = arith.constant 0 : index
      %14 = vector.load %arg4[%c0_10, %c0_11] : memref<1x128xf32, #tpu.memory_space<vmem>>, vector<1x128xf32>
      %15 = vector.broadcast %14 : vector<1x128xf32> to vector<256x128xf32>
      %16 = arith.addf %13, %15 : vector<256x128xf32>
      %c0_12 = arith.constant 0 : index
      %c0_13 = arith.constant 0 : index
      %17 = vector.load %arg5[%c0_12, %c0_13] : memref<256x128xf32, #tpu.memory_space<vmem>>, vector<256x128xf32>
      tpu.vector_store %arg5[%c0_12, %c0_13], %16 {strides = array<i32>} : memref<256x128xf32, #tpu.memory_space<vmem>>, vector<256x128xf32>,
    } else {
    }
    return
  }
  func.func @transform_0(%arg0: i32, %arg1: i32) -> (i32, i32) {
    %c0_i32 = arith.constant 0 : i32
    return %arg0, %arg1 : i32, i32
  }
  func.func @transform_1(%arg0: i32, %arg1: i32) -> (i32, i32) {
    %c0_i32 = arith.constant 0 : i32
    %c0_i32_0 = arith.constant 0 : i32
    return %arg1, %c0_i32 : i32, i32
  }
  func.func @transform_2(%arg0: i32, %arg1: i32) -> (i32, i32) {
    %c0_i32 = arith.constant 0 : i32
    %c0_i32_0 = arith.constant 0 : i32
    %c0_i32_1 = arith.constant 0 : i32
    return %c0_i32, %c0_i32_0 : i32, i32
  }
  func.func @transform_3(%arg0: i32, %arg1: i32) -> (i32, i32) {
    %c0_i32 = arith.constant 0 : i32
    %c0_i32_0 = arith.constant 0 : i32
    return %arg0, %c0_i32 : i32, i32
  }
}

</mosaic_0001>

<llo_original>
// kernel: graph_convolution.2
$region0: #{graph_convolution.2}
  #allocation0 [shape = 'u32[]', space=smem, size = 0x4, offset = 0x4, fixed_abs, tag = 'smem constant byte address 0x4 - core index']
  #allocation1 [shape = 'u32[144,128]{1,0:T(1,128)}', space=vmem, size = 0x12000, scoped, tag = 'internal scratch']
  %s0 = inlined_call_operand.vmem [shape: bf16[256,128], index: 0, kind: input, shape index: {}]
  %s1 = inlined_call_operand.vmem [shape: bf16[128,128], index: 1, kind: input, shape index: {}]
  %s2 = inlined_call_operand.vmem [shape: bf16[256,128], index: 2, kind: output, shape index: {}]
  %s3 = sld [smem:[#allocation0]]
  $region18: #{graph_convolution.2} parent=0
    _
  %s5 = ssub.s32 1, %s3
  %s6 = scalar_select 0, %s5, %s3
  // Predicated region
  $region2: #{graph_convolution.2} parent=0 // pred_check
    _
  $region3: #{graph_convolution.2} parent=0 // pred_check_branch
    %8 = sbr.rel (0) target = $region5
  $region4: #{graph_convolution.2} parent=0 // pred_region
    _
  $region5: #{graph_convolution.2} parent=0 // pred_fallthru
    _
  // Predicated region
  $region6: #{graph_convolution.2} parent=0 // pred_check
    _
  $region7: #{graph_convolution.2} parent=0 // pred_check_branch
    %10 = sbr.rel (0) target = $region9
  $region8: #{graph_convolution.2} parent=0 // pred_region
    _
  $region9: #{graph_convolution.2} parent=0 // pred_fallthru
    _
  %v12 = vld [vmem:[%s0] sm:$0xf]
  %v13 = vld [vmem:[%s0 + $0x4] sm:$0xf]
  %v14 = vld [vmem:[%s0 + $0x8] sm:$0xf]
  %v15 = vld [vmem:[%s0 + $0xc] sm:$0xf]
  %v16 = vld [vmem:[%s0 + $0x10] sm:$0xf]
  %v17 = vld [vmem:[%s0 + $0x14] sm:$0xf]
  %v18 = vld [vmem:[%s0 + $0x18] sm:$0xf]
  %v19 = vld [vmem:[%s0 + $0x1c] sm:$0xf]
  %v20 = vld [vmem:[%s0 + $0x20] sm:$0xf]
  %v21 = vld [vmem:[%s0 + $0x24] sm:$0xf]
  %v22 = vld [vmem:[%s0 + $0x28] sm:$0xf]
  %v23 = vld [vmem:[%s0 + $0x2c] sm:$0xf]
  %v24 = vld [vmem:[%s0 + $0x30] sm:$0xf]
  %v25 = vld [vmem:[%s0 + $0x34] sm:$0xf]
  %v26 = vld [vmem:[%s0 + $0x38] sm:$0xf]
  %v27 = vld [vmem:[%s0 + $0x3c] sm:$0xf]
  %v28 = vld [vmem:[%s0 + $0x40] sm:$0xf]
  %v29 = vld [vmem:[%s0 + $0x44] sm:$0xf]
  %v30 = vld [vmem:[%s0 + $0x48] sm:$0xf]
  %v31 = vld [vmem:[%s0 + $0x4c] sm:$0xf]
  %v32 = vld [vmem:[%s0 + $0x50] sm:$0xf]
  %v33 = vld [vmem:[%s0 + $0x54] sm:$0xf]
  %v34 = vld [vmem:[%s0 + $0x58] sm:$0xf]
  %v35 = vld [vmem:[%s0 + $0x5c] sm:$0xf]
  %v36 = vld [vmem:[%s0 + $0x60] sm:$0xf]
  %v37 = vld [vmem:[%s0 + $0x64] sm:$0xf]
  %v38 = vld [vmem:[%s0 + $0x68] sm:$0xf]
  %v39 = vld [vmem:[%s0 + $0x6c] sm:$0xf]
  %v40 = vld [vmem:[%s0 + $0x70] sm:$0xf]
  %v41 = vld [vmem:[%s0 + $0x74] sm:$0xf]
  %v42 = vld [vmem:[%s0 + $0x78] sm:$0xf]
  %v43 = vld [vmem:[%s0 + $0x7c] sm:$0xf]
  %v44 = vld [vmem:[%s1] sm:$0xf]
  %v45 = vld [vmem:[%s1 + $0x4] sm:$0xf]
  %v46 = vld [vmem:[%s1 + $0x8] sm:$0xf]
  %v47 = vld [vmem:[%s1 + $0xc] sm:$0xf]
  %v48 = vld [vmem:[%s1 + $0x10] sm:$0xf]
  %v49 = vld [vmem:[%s1 + $0x14] sm:$0xf]
  %v50 = vld [vmem:[%s1 + $0x18] sm:$0xf]
  %v51 = vld [vmem:[%s1 + $0x1c] sm:$0xf]
  %v52 = vld [vmem:[%s1 + $0x20] sm:$0xf]
  %v53 = vld [vmem:[%s1 + $0x24] sm:$0xf]
  %v54 = vld [vmem:[%s1 + $0x28] sm:$0xf]
  %v55 = vld [vmem:[%s1 + $0x2c] sm:$0xf]
  %v56 = vld [vmem:[%s1 + $0x30] sm:$0xf]
  %v57 = vld [vmem:[%s1 + $0x34] sm:$0xf]
  %v58 = vld [vmem:[%s1 + $0x38] sm:$0xf]
  %v59 = vld [vmem:[%s1 + $0x3c] sm:$0xf]
  %v92 = vunpack.c.l.b16 %v12
  %v93 = vunpack.c.l.b16 %v13
  %v94 = vunpack.c.l.b16 %v14
  %v95 = vunpack.c.l.b16 %v15
  %v96 = vunpack.c.l.b16 %v16
  %v97 = vunpack.c.l.b16 %v17
  %v98 = vunpack.c.l.b16 %v18
  %v99 = vunpack.c.l.b16 %v19
  %v100 = vunpack.c.l.b16 %v20
  %v101 = vunpack.c.l.b16 %v21
  %v102 = vunpack.c.l.b16 %v22
  %v103 = vunpack.c.l.b16 %v23
  %v104 = vunpack.c.l.b16 %v24
  %v105 = vunpack.c.l.b16 %v25
  %v106 = vunpack.c.l.b16 %v26
  %v107 = vunpack.c.l.b16 %v27
  %v108 = vunpack.c.l.b16 %v28
  %v109 = vunpack.c.l.b16 %v29
  %v110 = vunpack.c.l.b16 %v30
  %v111 = vunpack.c.l.b16 %v31
  %v112 = vunpack.c.l.b16 %v32
  %v113 = vunpack.c.l.b16 %v33
  %v114 = vunpack.c.l.b16 %v34
  %v115 = vunpack.c.l.b16 %v35
  %v116 = vunpack.c.l.b16 %v36
  %v117 = vunpack.c.l.b16 %v37
  %v118 = vunpack.c.l.b16 %v38
  %v119 = vunpack.c.l.b16 %v39
  %v120 = vunpack.c.l.b16 %v40
  %v121 = vunpack.c.l.b16 %v41
  %v122 = vunpack.c.l.b16 %v42
  %v123 = vunpack.c.l.b16 %v43
  %v124 = vpack.c.b16 %v93, %v92
  %v125 = vpack.c.b16 %v95, %v94
  %v126 = vpack.c.b16 %v97, %v96
  %v127 = vpack.c.b16 %v99, %v98
  %v128 = vpack.c.b16 %v101, %v100
  %v129 = vpack.c.b16 %v103, %v102
  %v130 = vpack.c.b16 %v105, %v104
  %v131 = vpack.c.b16 %v107, %v106
  %v132 = vpack.c.b16 %v109, %v108
  %v133 = vpack.c.b16 %v111, %v110
  %v134 = vpack.c.b16 %v113, %v112
  %v135 = vpack.c.b16 %v115, %v114
  %v136 = vpack.c.b16 %v117, %v116
  %v137 = vpack.c.b16 %v119, %v118
  %v138 = vpack.c.b16 %v121, %v120
  %v139 = vpack.c.b16 %v123, %v122
  %v172 = vunpack.c.l.b16 %v44
  %v173 = vunpack.c.l.b16 %v45
  %v174 = vunpack.c.l.b16 %v46
  %v175 = vunpack.c.l.b16 %v47
  %v176 = vunpack.c.l.b16 %v48
  %v177 = vunpack.c.l.b16 %v49
  %v178 = vunpack.c.l.b16 %v50
  %v179 = vunpack.c.l.b16 %v51
  %v180 = vunpack.c.l.b16 %v52
  %v181 = vunpack.c.l.b16 %v53
  %v182 = vunpack.c.l.b16 %v54
  %v183 = vunpack.c.l.b16 %v55
  %v184 = vunpack.c.l.b16 %v56
  %v185 = vunpack.c.l.b16 %v57
  %v186 = vunpack.c.l.b16 %v58
  %v187 = vunpack.c.l.b16 %v59
  %v188 = vpack.c.b16 %v173, %v172
  %v189 = vpack.c.b16 %v175, %v174
  %v190 = vpack.c.b16 %v177, %v176
  %v191 = vpack.c.b16 %v179, %v178
  %v192 = vpack.c.b16 %v181, %v180
  %v193 = vpack.c.b16 %v183, %v182
  %v194 = vpack.c.b16 %v185, %v184
  %v195 = vpack.c.b16 %v187, %v186
  %204 = vmatprep.subr.bf16.mxu0 0
  %205 = vmatpush1.bf16.msra.mxu0 %v195
  %206 = vmatprep.subr.bf16.mxu0 0
  %207 = vmatpush1.bf16.msra.mxu0 %v194
  %208 = vmatprep.subr.bf16.mxu0 0
  %209 = vmatpush1.bf16.msra.mxu0 %v193
  %210 = vmatprep.subr.bf16.mxu0 0
  %211 = vmatpush1.bf16.msra.mxu0 %v192
  %212 = vmatprep.subr.bf16.mxu0 0
  %213 = vmatpush1.bf16.msra.mxu0 %v191
  %214 = vmatprep.subr.bf16.mxu0 0
  %215 = vmatpush1.bf16.msra.mxu0 %v190
  %216 = vmatprep.subr.bf16.mxu0 0
  %217 = vmatpush1.bf16.msra.mxu0 %v189
  %218 = vmatprep.subr.bf16.mxu0 0
  %219 = vmatpush1.bf16.msra.mxu0 %v188
  %220 = vmatprep.subr.bf16.mxu0 0
  %221 = vmatpush2.bf16.msra.mxu0 0
  %222 = vmatprep.subr.bf16.mxu0 0
  %223 = vmatpush2.bf16.msra.mxu0 0
  %224 = vmatprep.subr.bf16.mxu0 0
  %225 = vmatpush2.bf16.msra.mxu0 0
  %226 = vmatprep.subr.bf16.mxu0 0
  %227 = vmatpush2.bf16.msra.mxu0 0
  %228 = vmatprep.subr.bf16.mxu0 0
  %229 = vmatpush2.bf16.msra.mxu0 0
  %230 = vmatprep.subr.bf16.mxu0 0
  %231 = vmatpush2.bf16.msra.mxu0 0
  %232 = vmatprep.subr.bf16.mxu0 0
  %233 = vmatpush2.bf16.msra.mxu0 0
  %234 = vmatprep.subr.bf16.mxu0 0
  %235 = vmatpush2.bf16.msra.mxu0 0
  %236 = vmatprep.mubr.bf16.mxu0 0
  %237 = vmatmul.mubr.bf16.gmra.mxu0 %v124
  %v238 = vpop.f32.mrf.mxu0
  %v239 = vadd.f32 0.0, %v238
  %v240 = vpop.f32.mrf.mxu0
  %v241 = vpop.f32.mrf.mxu0
  %v242 = vadd.f32 0.0, %v241
  %v243 = vpop.f32.mrf.mxu0
  %244 = vmatprep.mubr.bf16.mxu0 0
  %245 = vmatmul.mubr.bf16.gmra.mxu0 %v125
  %v246 = vpop.f32.mrf.mxu0
  %v247 = vadd.f32 0.0, %v246
  %v248 = vpop.f32.mrf.mxu0
  %v249 = vpop.f32.mrf.mxu0
  %v250 = vadd.f32 0.0, %v249
  %v251 = vpop.f32.mrf.mxu0
  %252 = vmatprep.mubr.bf16.mxu0 0
  %253 = vmatmul.mubr.bf16.gmra.mxu0 %v126
  %v254 = vpop.f32.mrf.mxu0
  %v255 = vadd.f32 0.0, %v254
  %v256 = vpop.f32.mrf.mxu0
  %v257 = vpop.f32.mrf.mxu0
  %v258 = vadd.f32 0.0, %v257
  %v259 = vpop.f32.mrf.mxu0
  %260 = vmatprep.mubr.bf16.mxu0 0
  %261 = vmatmul.mubr.bf16.gmra.mxu0 %v127
  %v262 = vpop.f32.mrf.mxu0
  %v263 = vadd.f32 0.0, %v262
  %v264 = vpop.f32.mrf.mxu0
  %v265 = vpop.f32.mrf.mxu0
  %v266 = vadd.f32 0.0, %v265
  %v267 = vpop.f32.mrf.mxu0
  %268 = vmatprep.mubr.bf16.mxu0 0
  %269 = vmatmul.mubr.bf16.gmra.mxu0 %v128
  %v270 = vpop.f32.mrf.mxu0
  %v271 = vadd.f32 0.0, %v270
  %v272 = vpop.f32.mrf.mxu0
  %v273 = vpop.f32.mrf.mxu0
  %v274 = vadd.f32 0.0, %v273
  %v275 = vpop.f32.mrf.mxu0
  %276 = vmatprep.mubr.bf16.mxu0 0
  %277 = vmatmul.mubr.bf16.gmra.mxu0 %v129
  %v278 = vpop.f32.mrf.mxu0
  %v279 = vadd.f32 0.0, %v278
  %v280 = vpop.f32.mrf.mxu0
  %v281 = vpop.f32.mrf.mxu0
  %v282 = vadd.f32 0.0, %v281
  %v283 = vpop.f32.mrf.mxu0
  %284 = vmatprep.mubr.bf16.mxu0 0
  %285 = vmatmul.mubr.bf16.gmra.mxu0 %v130
  %v286 = vpop.f32.mrf.mxu0
  %v287 = vadd.f32 0.0, %v286
  %v288 = vpop.f32.mrf.mxu0
  %v289 = vpop.f32.mrf.mxu0
  %v290 = vadd.f32 0.0, %v289
  %v291 = vpop.f32.mrf.mxu0
  %292 = vmatprep.mubr.bf16.mxu0 0
  %293 = vmatmul.mubr.bf16.gmra.mxu0 %v131
  %v294 = vpop.f32.mrf.mxu0
  %v295 = vadd.f32 0.0, %v294
  %v296 = vpop.f32.mrf.mxu0
  %v297 = vpop.f32.mrf.mxu0
  %v298 = vadd.f32 0.0, %v297
  %v299 = vpop.f32.mrf.mxu0
  %300 = vmatprep.mubr.bf16.mxu0 0
  %301 = vmatmul.mubr.bf16.gmra.mxu0 %v132
  %v302 = vpop.f32.mrf.mxu0
  %v303 = vadd.f32 0.0, %v302
  %v304 = vpop.f32.mrf.mxu0
  %v305 = vpop.f32.mrf.mxu0
  %v306 = vadd.f32 0.0, %v305
  %v307 = vpop.f32.mrf.mxu0
  %308 = vmatprep.mubr.bf16.mxu0 0
  %309 = vmatmul.mubr.bf16.gmra.mxu0 %v133
  %v310 = vpop.f32.mrf.mxu0
  %v311 = vadd.f32 0.0, %v310
  %v312 = vpop.f32.mrf.mxu0
  %v313 = vpop.f32.mrf.mxu0
  %v314 = vadd.f32 0.0, %v313
  %v315 = vpop.f32.mrf.mxu0
  %316 = vmatprep.mubr.bf16.mxu0 0
  %317 = vmatmul.mubr.bf16.gmra.mxu0 %v134
  %v318 = vpop.f32.mrf.mxu0
  %v319 = vadd.f32 0.0, %v318
  %v320 = vpop.f32.mrf.mxu0
  %v321 = vpop.f32.mrf.mxu0
  %v322 = vadd.f32 0.0, %v321
  %v323 = vpop.f32.mrf.mxu0
  %324 = vmatprep.mubr.bf16.mxu0 0
  %325 = vmatmul.mubr.bf16.gmra.mxu0 %v135
  %v326 = vpop.f32.mrf.mxu0
  %v327 = vadd.f32 0.0, %v326
  %v328 = vpop.f32.mrf.mxu0
  %v329 = vpop.f32.mrf.mxu0
  %v330 = vadd.f32 0.0, %v329
  %v331 = vpop.f32.mrf.mxu0
  %332 = vmatprep.mubr.bf16.mxu0 0
  %333 = vmatmul.mubr.bf16.gmra.mxu0 %v136
  %v334 = vpop.f32.mrf.mxu0
  %v335 = vadd.f32 0.0, %v334
  %v336 = vpop.f32.mrf.mxu0
  %v337 = vpop.f32.mrf.mxu0
  %v338 = vadd.f32 0.0, %v337
  %v339 = vpop.f32.mrf.mxu0
  %340 = vmatprep.mubr.bf16.mxu0 0
  %341 = vmatmul.mubr.bf16.gmra.mxu0 %v137
  %v342 = vpop.f32.mrf.mxu0
  %v343 = vadd.f32 0.0, %v342
  %v344 = vpop.f32.mrf.mxu0
  %v345 = vpop.f32.mrf.mxu0
  %v346 = vadd.f32 0.0, %v345
  %v347 = vpop.f32.mrf.mxu0
  %348 = vmatprep.mubr.bf16.mxu0 0
  %349 = vmatmul.mubr.bf16.gmra.mxu0 %v138
  %v350 = vpop.f32.mrf.mxu0
  %v351 = vadd.f32 0.0, %v350
  %v352 = vpop.f32.mrf.mxu0
  %v353 = vpop.f32.mrf.mxu0
  %v354 = vadd.f32 0.0, %v353
  %v355 = vpop.f32.mrf.mxu0
  %356 = vmatprep.mubr.bf16.mxu0 0
  %357 = vmatmul.mubr.bf16.gmra.mxu0 %v139
  %v358 = vpop.f32.mrf.mxu0
  %v359 = vadd.f32 0.0, %v358
  %v360 = vpop.f32.mrf.mxu0
  %v361 = vpop.f32.mrf.mxu0
  %v362 = vadd.f32 0.0, %v361
  %v363 = vpop.f32.mrf.mxu0
  %364 = vdwg.mxu0
  %v365 = vpack.c.bf16 %v242, %v239
  %v366 = vpack.c.bf16 %v250, %v247
  %v367 = vpack.c.bf16 %v258, %v255
  %v368 = vpack.c.bf16 %v266, %v263
  %v369 = vpack.c.bf16 %v274, %v271
  %v370 = vpack.c.bf16 %v282, %v279
  %v371 = vpack.c.bf16 %v290, %v287
  %v372 = vpack.c.bf16 %v298, %v295
  %v373 = vpack.c.bf16 %v306, %v303
  %v374 = vpack.c.bf16 %v314, %v311
  %v375 = vpack.c.bf16 %v322, %v319
  %v376 = vpack.c.bf16 %v330, %v327
  %v377 = vpack.c.bf16 %v338, %v335
  %v378 = vpack.c.bf16 %v346, %v343
  %v379 = vpack.c.bf16 %v354, %v351
  %v380 = vpack.c.bf16 %v362, %v359
  %v397 = vunpack.c.l.b16 %v365
  %v398 = vunpack.c.h.b16 %v365
  %v399 = vunpack.c.l.b16 %v366
  %v400 = vunpack.c.h.b16 %v366
  %v401 = vunpack.c.l.b16 %v367
  %v402 = vunpack.c.h.b16 %v367
  %v403 = vunpack.c.l.b16 %v368
  %v404 = vunpack.c.h.b16 %v368
  %v405 = vunpack.c.l.b16 %v369
  %v406 = vunpack.c.h.b16 %v369
  %v407 = vunpack.c.l.b16 %v370
  %v408 = vunpack.c.h.b16 %v370
  %v409 = vunpack.c.l.b16 %v371
  %v410 = vunpack.c.h.b16 %v371
  %v411 = vunpack.c.l.b16 %v372
  %v412 = vunpack.c.h.b16 %v372
  %v413 = vunpack.c.l.b16 %v373
  %v414 = vunpack.c.h.b16 %v373
  %v415 = vunpack.c.l.b16 %v374
  %v416 = vunpack.c.h.b16 %v374
  %v417 = vunpack.c.l.b16 %v375
  %v418 = vunpack.c.h.b16 %v375
  %v419 = vunpack.c.l.b16 %v376
  %v420 = vunpack.c.h.b16 %v376
  %v421 = vunpack.c.l.b16 %v377
  %v422 = vunpack.c.h.b16 %v377
  %v423 = vunpack.c.l.b16 %v378
  %v424 = vunpack.c.h.b16 %v378
  %v425 = vunpack.c.l.b16 %v379
  %v426 = vunpack.c.h.b16 %v379
  %v427 = vunpack.c.l.b16 %v380
  %v428 = vunpack.c.h.b16 %v380
  %v429 = vpack.c.b16 %v397, %v397
  %v430 = vpack.c.b16 %v398, %v398
  %v431 = vpack.c.b16 %v399, %v399
  %v432 = vpack.c.b16 %v400, %v400
  %v433 = vpack.c.b16 %v401, %v401
  %v434 = vpack.c.b16 %v402, %v402
  %v435 = vpack.c.b16 %v403, %v403
  %v436 = vpack.c.b16 %v404, %v404
  %v437 = vpack.c.b16 %v405, %v405
  %v438 = vpack.c.b16 %v406, %v406
  %v439 = vpack.c.b16 %v407, %v407
  %v440 = vpack.c.b16 %v408, %v408
  %v441 = vpack.c.b16 %v409, %v409
  %v442 = vpack.c.b16 %v410, %v410
  %v443 = vpack.c.b16 %v411, %v411
  %v444 = vpack.c.b16 %v412, %v412
  %v445 = vpack.c.b16 %v413, %v413
  %v446 = vpack.c.b16 %v414, %v414
  %v447 = vpack.c.b16 %v415, %v415
  %v448 = vpack.c.b16 %v416, %v416
  %v449 = vpack.c.b16 %v417, %v417
  %v450 = vpack.c.b16 %v418, %v418
  %v451 = vpack.c.b16 %v419, %v419
  %v452 = vpack.c.b16 %v420, %v420
  %v453 = vpack.c.b16 %v421, %v421
  %v454 = vpack.c.b16 %v422, %v422
  %v455 = vpack.c.b16 %v423, %v423
  %v456 = vpack.c.b16 %v424, %v424
  %v457 = vpack.c.b16 %v425, %v425
  %v458 = vpack.c.b16 %v426, %v426
  %v459 = vpack.c.b16 %v427, %v427
  %v460 = vpack.c.b16 %v428, %v428
  %493 = vst [vmem:[%s2] sm:$0xf] %v429
  %494 = vst [vmem:[%s2 + $0x4] sm:$0xf] %v430
  %495 = vst [vmem:[%s2 + $0x8] sm:$0xf] %v431
  %496 = vst [vmem:[%s2 + $0xc] sm:$0xf] %v432
  %497 = vst [vmem:[%s2 + $0x10] sm:$0xf] %v433
  %498 = vst [vmem:[%s2 + $0x14] sm:$0xf] %v434
  %499 = vst [vmem:[%s2 + $0x18] sm:$0xf] %v435
  %500 = vst [vmem:[%s2 + $0x1c] sm:$0xf] %v436
  %501 = vst [vmem:[%s2 + $0x20] sm:$0xf] %v437
  %502 = vst [vmem:[%s2 + $0x24] sm:$0xf] %v438
  %503 = vst [vmem:[%s2 + $0x28] sm:$0xf] %v439
  %504 = vst [vmem:[%s2 + $0x2c] sm:$0xf] %v440
  %505 = vst [vmem:[%s2 + $0x30] sm:$0xf] %v441
  %506 = vst [vmem:[%s2 + $0x34] sm:$0xf] %v442
  %507 = vst [vmem:[%s2 + $0x38] sm:$0xf] %v443
  %508 = vst [vmem:[%s2 + $0x3c] sm:$0xf] %v444
  %509 = vst [vmem:[%s2 + $0x40] sm:$0xf] %v445
  %510 = vst [vmem:[%s2 + $0x44] sm:$0xf] %v446
  %511 = vst [vmem:[%s2 + $0x48] sm:$0xf] %v447
  %512 = vst [vmem:[%s2 + $0x4c] sm:$0xf] %v448
  %513 = vst [vmem:[%s2 + $0x50] sm:$0xf] %v449
  %514 = vst [vmem:[%s2 + $0x54] sm:$0xf] %v450
  %515 = vst [vmem:[%s2 + $0x58] sm:$0xf] %v451
  %516 = vst [vmem:[%s2 + $0x5c] sm:$0xf] %v452
  %517 = vst [vmem:[%s2 + $0x60] sm:$0xf] %v453
  %518 = vst [vmem:[%s2 + $0x64] sm:$0xf] %v454
  %519 = vst [vmem:[%s2 + $0x68] sm:$0xf] %v455
  %520 = vst [vmem:[%s2 + $0x6c] sm:$0xf] %v456
  %521 = vst [vmem:[%s2 + $0x70] sm:$0xf] %v457
  %522 = vst [vmem:[%s2 + $0x74] sm:$0xf] %v458
  %523 = vst [vmem:[%s2 + $0x78] sm:$0xf] %v459
  %524 = vst [vmem:[%s2 + $0x7c] sm:$0xf] %v460
  // Predicated region
  $region10: #{graph_convolution.2} parent=0 // pred_check
    _
  $region11: #{graph_convolution.2} parent=0 // pred_check_branch
    %526 = sbr.rel (0) target = $region13
  $region12: #{graph_convolution.2} parent=0 // pred_region
    _
  $region13: #{graph_convolution.2} parent=0 // pred_fallthru
    _
  // Predicated region
  $region14: #{graph_convolution.2} parent=0 // pred_check
    _
  $region15: #{graph_convolution.2} parent=0 // pred_check_branch
    %528 = sbr.rel (0) target = $region17
  $region16: #{graph_convolution.2} parent=0 // pred_region
    _
  $region17: #{graph_convolution.2} parent=0 // pred_fallthru
    _

// kernel: graph_convolution.3
$region0: #{graph_convolution.3}
  #allocation0 [shape = 'u32[]', space=smem, size = 0x4, offset = 0x4, fixed_abs, tag = 'smem constant byte address 0x4 - core index']
  #allocation1 [shape = 'u32[144,128]{1,0:T(1,128)}', space=vmem, size = 0x12000, scoped, tag = 'internal scratch']
  %s0 = inlined_call_operand.vmem [shape: f32[256,256], index: 0, kind: input, shape index: {}]
  %s1 = inlined_call_operand.vmem [shape: bf16[256,128], index: 1, kind: input, shape index: {}]
  %s2 = inlined_call_operand.vmem [shape: f32[1,128], index: 2, kind: input, shape index: {}]
  %s3 = inlined_call_operand.vmem [shape: f32[256,128], index: 3, kind: output, shape index: {}]
  %s4 = sld [smem:[#allocation0]]
  $region34: #{graph_convolution.3} parent=0
    _
  %s6 = ssub.s32 1, %s4
  %s7 = scalar_select 0, %s6, %s4
  // Predicated region
  $region2: #{graph_convolution.3} parent=0 // pred_check
    _
  $region3: #{graph_convolution.3} parent=0 // pred_check_branch
    %9 = sbr.rel (0) target = $region5
  $region4: #{graph_convolution.3} parent=0 // pred_region
    _
  $region5: #{graph_convolution.3} parent=0 // pred_fallthru
    _
  // Predicated region
  $region6: #{graph_convolution.3} parent=0 // pred_check
    _
  $region7: #{graph_convolution.3} parent=0 // pred_check_branch
    %11 = sbr.rel (0) target = $region9
  $region8: #{graph_convolution.3} parent=0 // pred_region
    _
  $region9: #{graph_convolution.3} parent=0 // pred_fallthru
    _
  // Predicated region
  $region10: #{graph_convolution.3} parent=0 // pred_check
    _
  $region11: #{graph_convolution.3} parent=0 // pred_check_branch
    %13 = sbr.rel (0) target = $region13
  $region12: #{graph_convolution.3} parent=0 // pred_region
    _
  $region13: #{graph_convolution.3} parent=0 // pred_fallthru
    _
  %v15 = vld [vmem:[%s0] sm:$0xff]
  %v16 = vld [vmem:[%s0 + $0x8] sm:$0xff]
  %v17 = vld [vmem:[%s0 + $0x10] sm:$0xff]
  %v18 = vld [vmem:[%s0 + $0x18] sm:$0xff]
  %v19 = vld [vmem:[%s0 + $0x20] sm:$0xff]
  %v20 = vld [vmem:[%s0 + $0x28] sm:$0xff]
  %v21 = vld [vmem:[%s0 + $0x30] sm:$0xff]
  %v22 = vld [vmem:[%s0 + $0x38] sm:$0xff]
  %v23 = vld [vmem:[%s0 + $0x40] sm:$0xff]
  %v24 = vld [vmem:[%s0 + $0x48] sm:$0xff]
  %v25 = vld [vmem:[%s0 + $0x50] sm:$0xff]
  %v26 = vld [vmem:[%s0 + $0x58] sm:$0xff]
  %v27 = vld [vmem:[%s0 + $0x60] sm:$0xff]
  %v28 = vld [vmem:[%s0 + $0x68] sm:$0xff]
  %v29 = vld [vmem:[%s0 + $0x70] sm:$0xff]
  %v30 = vld [vmem:[%s0 + $0x78] sm:$0xff]
  %v31 = vld [vmem:[%s0 + $0x80] sm:$0xff]
  %v32 = vld [vmem:[%s0 + $0x88] sm:$0xff]
  %v33 = vld [vmem:[%s0 + $0x90] sm:$0xff]
  %v34 = vld [vmem:[%s0 + $0x98] sm:$0xff]
  %v35 = vld [vmem:[%s0 + $0xa0] sm:$0xff]
  %v36 = vld [vmem:[%s0 + $0xa8] sm:$0xff]
  %v37 = vld [vmem:[%s0 + $0xb0] sm:$0xff]
  %v38 = vld [vmem:[%s0 + $0xb8] sm:$0xff]
  %v39 = vld [vmem:[%s0 + $0xc0] sm:$0xff]
  %v40 = vld [vmem:[%s0 + $0xc8] sm:$0xff]
  %v41 = vld [vmem:[%s0 + $0xd0] sm:$0xff]
  %v42 = vld [vmem:[%s0 + $0xd8] sm:$0xff]
  %v43 = vld [vmem:[%s0 + $0xe0] sm:$0xff]
  %v44 = vld [vmem:[%s0 + $0xe8] sm:$0xff]
  %v45 = vld [vmem:[%s0 + $0xf0] sm:$0xff]
  %v46 = vld [vmem:[%s0 + $0xf8] sm:$0xff]
  %v47 = vld [vmem:[%s0 + $0x100] sm:$0xff]
  %v48 = vld [vmem:[%s0 + $0x108] sm:$0xff]
  %v49 = vld [vmem:[%s0 + $0x110] sm:$0xff]
  %v50 = vld [vmem:[%s0 + $0x118] sm:$0xff]
  %v51 = vld [vmem:[%s0 + $0x120] sm:$0xff]
  %v52 = vld [vmem:[%s0 + $0x128] sm:$0xff]
  %v53 = vld [vmem:[%s0 + $0x130] sm:$0xff]
  %v54 = vld [vmem:[%s0 + $0x138] sm:$0xff]
  %v55 = vld [vmem:[%s0 + $0x140] sm:$0xff]
  %v56 = vld [vmem:[%s0 + $0x148] sm:$0xff]
  %v57 = vld [vmem:[%s0 + $0x150] sm:$0xff]
  %v58 = vld [vmem:[%s0 + $0x158] sm:$0xff]
  %v59 = vld [vmem:[%s0 + $0x160] sm:$0xff]
  %v60 = vld [vmem:[%s0 + $0x168] sm:$0xff]
  %v61 = vld [vmem:[%s0 + $0x170] sm:$0xff]
  %v62 = vld [vmem:[%s0 + $0x178] sm:$0xff]
  %v63 = vld [vmem:[%s0 + $0x180] sm:$0xff]
  %v64 = vld [vmem:[%s0 + $0x188] sm:$0xff]
  %v65 = vld [vmem:[%s0 + $0x190] sm:$0xff]
  %v66 = vld [vmem:[%s0 + $0x198] sm:$0xff]
  %v67 = vld [vmem:[%s0 + $0x1a0] sm:$0xff]
  %v68 = vld [vmem:[%s0 + $0x1a8] sm:$0xff]
  %v69 = vld [vmem:[%s0 + $0x1b0] sm:$0xff]
  %v70 = vld [vmem:[%s0 + $0x1b8] sm:$0xff]
  %v71 = vld [vmem:[%s0 + $0x1c0] sm:$0xff]
  %v72 = vld [vmem:[%s0 + $0x1c8] sm:$0xff]
  %v73 = vld [vmem:[%s0 + $0x1d0] sm:$0xff]
  %v74 = vld [vmem:[%s0 + $0x1d8] sm:$0xff]
  %v75 = vld [vmem:[%s0 + $0x1e0] sm:$0xff]
  %v76 = vld [vmem:[%s0 + $0x1e8] sm:$0xff]
  %v77 = vld [vmem:[%s0 + $0x1f0] sm:$0xff]
  %v78 = vld [vmem:[%s0 + $0x1f8] sm:$0xff]
  %v79 = vpack.c.bf16 %v17, %v15
  %v80 = vpack.c.bf16 %v18, %v16
  %v81 = vpack.c.bf16 %v21, %v19
  %v82 = vpack.c.bf16 %v22, %v20
  %v83 = vpack.c.bf16 %v25, %v23
  %v84 = vpack.c.bf16 %v26, %v24
  %v85 = vpack.c.bf16 %v29, %v27
  %v86 = vpack.c.bf16 %v30, %v28
  %v87 = vpack.c.bf16 %v33, %v31
  %v88 = vpack.c.bf16 %v34, %v32
  %v89 = vpack.c.bf16 %v37, %v35
  %v90 = vpack.c.bf16 %v38, %v36
  %v91 = vpack.c.bf16 %v41, %v39
  %v92 = vpack.c.bf16 %v42, %v40
  %v93 = vpack.c.bf16 %v45, %v43
  %v94 = vpack.c.bf16 %v46, %v44
  %v95 = vpack.c.bf16 %v49, %v47
  %v96 = vpack.c.bf16 %v50, %v48
  %v97 = vpack.c.bf16 %v53, %v51
  %v98 = vpack.c.bf16 %v54, %v52
  %v99 = vpack.c.bf16 %v57, %v55
  %v100 = vpack.c.bf16 %v58, %v56
  %v101 = vpack.c.bf16 %v61, %v59
  %v102 = vpack.c.bf16 %v62, %v60
  %v103 = vpack.c.bf16 %v65, %v63
  %v104 = vpack.c.bf16 %v66, %v64
  %v105 = vpack.c.bf16 %v69, %v67
  %v106 = vpack.c.bf16 %v70, %v68
  %v107 = vpack.c.bf16 %v73, %v71
  %v108 = vpack.c.bf16 %v74, %v72
  %v109 = vpack.c.bf16 %v77, %v75
  %v110 = vpack.c.bf16 %v78, %v76
  %v111 = vld [vmem:[%s1] sm:$0xf]
  %v112 = vld [vmem:[%s1 + $0x4] sm:$0xf]
  %v113 = vld [vmem:[%s1 + $0x8] sm:$0xf]
  %v114 = vld [vmem:[%s1 + $0xc] sm:$0xf]
  %v115 = vld [vmem:[%s1 + $0x10] sm:$0xf]
  %v116 = vld [vmem:[%s1 + $0x14] sm:$0xf]
  %v117 = vld [vmem:[%s1 + $0x18] sm:$0xf]
  %v118 = vld [vmem:[%s1 + $0x1c] sm:$0xf]
  %v119 = vld [vmem:[%s1 + $0x20] sm:$0xf]
  %v120 = vld [vmem:[%s1 + $0x24] sm:$0xf]
  %v121 = vld [vmem:[%s1 + $0x28] sm:$0xf]
  %v122 = vld [vmem:[%s1 + $0x2c] sm:$0xf]
  %v123 = vld [vmem:[%s1 + $0x30] sm:$0xf]
  %v124 = vld [vmem:[%s1 + $0x34] sm:$0xf]
  %v125 = vld [vmem:[%s1 + $0x38] sm:$0xf]
  %v126 = vld [vmem:[%s1 + $0x3c] sm:$0xf]
  %v127 = vld [vmem:[%s1 + $0x40] sm:$0xf]
  %v128 = vld [vmem:[%s1 + $0x44] sm:$0xf]
  %v129 = vld [vmem:[%s1 + $0x48] sm:$0xf]
  %v130 = vld [vmem:[%s1 + $0x4c] sm:$0xf]
  %v131 = vld [vmem:[%s1 + $0x50] sm:$0xf]
  %v132 = vld [vmem:[%s1 + $0x54] sm:$0xf]
  %v133 = vld [vmem:[%s1 + $0x58] sm:$0xf]
  %v134 = vld [vmem:[%s1 + $0x5c] sm:$0xf]
  %v135 = vld [vmem:[%s1 + $0x60] sm:$0xf]
  %v136 = vld [vmem:[%s1 + $0x64] sm:$0xf]
  %v137 = vld [vmem:[%s1 + $0x68] sm:$0xf]
  %v138 = vld [vmem:[%s1 + $0x6c] sm:$0xf]
  %v139 = vld [vmem:[%s1 + $0x70] sm:$0xf]
  %v140 = vld [vmem:[%s1 + $0x74] sm:$0xf]
  %v141 = vld [vmem:[%s1 + $0x78] sm:$0xf]
  %v142 = vld [vmem:[%s1 + $0x7c] sm:$0xf]
  %v175 = vunpack.c.l.b16 %v111
  %v176 = vunpack.c.l.b16 %v112
  %v177 = vunpack.c.l.b16 %v113
  %v178 = vunpack.c.l.b16 %v114
  %v179 = vunpack.c.l.b16 %v115
  %v180 = vunpack.c.l.b16 %v116
  %v181 = vunpack.c.l.b16 %v117
  %v182 = vunpack.c.l.b16 %v118
  %v183 = vunpack.c.l.b16 %v119
  %v184 = vunpack.c.l.b16 %v120
  %v185 = vunpack.c.l.b16 %v121
  %v186 = vunpack.c.l.b16 %v122
  %v187 = vunpack.c.l.b16 %v123
  %v188 = vunpack.c.l.b16 %v124
  %v189 = vunpack.c.l.b16 %v125
  %v190 = vunpack.c.l.b16 %v126
  %v191 = vunpack.c.l.b16 %v127
  %v192 = vunpack.c.l.b16 %v128
  %v193 = vunpack.c.l.b16 %v129
  %v194 = vunpack.c.l.b16 %v130
  %v195 = vunpack.c.l.b16 %v131
  %v196 = vunpack.c.l.b16 %v132
  %v197 = vunpack.c.l.b16 %v133
  %v198 = vunpack.c.l.b16 %v134
  %v199 = vunpack.c.l.b16 %v135
  %v200 = vunpack.c.l.b16 %v136
  %v201 = vunpack.c.l.b16 %v137
  %v202 = vunpack.c.l.b16 %v138
  %v203 = vunpack.c.l.b16 %v139
  %v204 = vunpack.c.l.b16 %v140
  %v205 = vunpack.c.l.b16 %v141
  %v206 = vunpack.c.l.b16 %v142
  %v207 = vpack.c.b16 %v176, %v175
  %v208 = vpack.c.b16 %v178, %v177
  %v209 = vpack.c.b16 %v180, %v179
  %v210 = vpack.c.b16 %v182, %v181
  %v211 = vpack.c.b16 %v184, %v183
  %v212 = vpack.c.b16 %v186, %v185
  %v213 = vpack.c.b16 %v188, %v187
  %v214 = vpack.c.b16 %v190, %v189
  %v215 = vpack.c.b16 %v192, %v191
  %v216 = vpack.c.b16 %v194, %v193
  %v217 = vpack.c.b16 %v196, %v195
  %v218 = vpack.c.b16 %v198, %v197
  %v219 = vpack.c.b16 %v200, %v199
  %v220 = vpack.c.b16 %v202, %v201
  %v221 = vpack.c.b16 %v204, %v203
  %v222 = vpack.c.b16 %v206, %v205
  %239 = vmatprep.subr.bf16.mxu0 0
  %240 = vmatpush1.bf16.msra.mxu0 %v214
  %241 = vmatprep.subr.bf16.mxu0 0
  %242 = vmatpush1.bf16.msra.mxu0 %v213
  %243 = vmatprep.subr.bf16.mxu0 0
  %244 = vmatpush1.bf16.msra.mxu0 %v212
  %245 = vmatprep.subr.bf16.mxu0 0
  %246 = vmatpush1.bf16.msra.mxu0 %v211
  %247 = vmatprep.subr.bf16.mxu0 0
  %248 = vmatpush1.bf16.msra.mxu0 %v210
  %249 = vmatprep.subr.bf16.mxu0 0
  %250 = vmatpush1.bf16.msra.mxu0 %v209
  %251 = vmatprep.subr.bf16.mxu0 0
  %252 = vmatpush1.bf16.msra.mxu0 %v208
  %253 = vmatprep.subr.bf16.mxu0 0
  %254 = vmatpush1.bf16.msra.mxu0 %v207
  %255 = vmatprep.subr.bf16.mxu0 0
  %256 = vmatpush2.bf16.msra.mxu0 %v222
  %257 = vmatprep.subr.bf16.mxu0 0
  %258 = vmatpush2.bf16.msra.mxu0 %v221
  %259 = vmatprep.subr.bf16.mxu0 0
  %260 = vmatpush2.bf16.msra.mxu0 %v220
  %261 = vmatprep.subr.bf16.mxu0 0
  %262 = vmatpush2.bf16.msra.mxu0 %v219
  %263 = vmatprep.subr.bf16.mxu0 0
  %264 = vmatpush2.bf16.msra.mxu0 %v218
  %265 = vmatprep.subr.bf16.mxu0 0
  %266 = vmatpush2.bf16.msra.mxu0 %v217
  %267 = vmatprep.subr.bf16.mxu0 0
  %268 = vmatpush2.bf16.msra.mxu0 %v216
  %269 = vmatprep.subr.bf16.mxu0 0
  %270 = vmatpush2.bf16.msra.mxu0 %v215
  %271 = vmatprep.mubr.bf16.mxu0 %v80
  %272 = vmatmul.mubr.bf16.gmra.mxu0 %v79
  %v273 = vpop.f32.mrf.mxu0
  %v274 = vadd.f32 0.0, %v273
  %v275 = vpop.f32.mrf.mxu0
  %v276 = vpop.f32.mrf.mxu0
  %v277 = vadd.f32 0.0, %v276
  %v278 = vpop.f32.mrf.mxu0
  %279 = vmatprep.mubr.bf16.mxu0 %v82
  %280 = vmatmul.mubr.bf16.gmra.mxu0 %v81
  %v281 = vpop.f32.mrf.mxu0
  %v282 = vadd.f32 0.0, %v281
  %v283 = vpop.f32.mrf.mxu0
  %v284 = vpop.f32.mrf.mxu0
  %v285 = vadd.f32 0.0, %v284
  %v286 = vpop.f32.mrf.mxu0
  %287 = vmatprep.mubr.bf16.mxu0 %v84
  %288 = vmatmul.mubr.bf16.gmra.mxu0 %v83
  %v289 = vpop.f32.mrf.mxu0
  %v290 = vadd.f32 0.0, %v289
  %v291 = vpop.f32.mrf.mxu0
  %v292 = vpop.f32.mrf.mxu0
  %v293 = vadd.f32 0.0, %v292
  %v294 = vpop.f32.mrf.mxu0
  %295 = vmatprep.mubr.bf16.mxu0 %v86
  %296 = vmatmul.mubr.bf16.gmra.mxu0 %v85
  %v297 = vpop.f32.mrf.mxu0
  %v298 = vadd.f32 0.0, %v297
  %v299 = vpop.f32.mrf.mxu0
  %v300 = vpop.f32.mrf.mxu0
  %v301 = vadd.f32 0.0, %v300
  %v302 = vpop.f32.mrf.mxu0
  %303 = vmatprep.mubr.bf16.mxu0 %v88
  %304 = vmatmul.mubr.bf16.gmra.mxu0 %v87
  %v305 = vpop.f32.mrf.mxu0
  %v306 = vadd.f32 0.0, %v305
  %v307 = vpop.f32.mrf.mxu0
  %v308 = vpop.f32.mrf.mxu0
  %v309 = vadd.f32 0.0, %v308
  %v310 = vpop.f32.mrf.mxu0
  %311 = vmatprep.mubr.bf16.mxu0 %v90
  %312 = vmatmul.mubr.bf16.gmra.mxu0 %v89
  %v313 = vpop.f32.mrf.mxu0
  %v314 = vadd.f32 0.0, %v313
  %v315 = vpop.f32.mrf.mxu0
  %v316 = vpop.f32.mrf.mxu0
  %v317 = vadd.f32 0.0, %v316
  %v318 = vpop.f32.mrf.mxu0
  %319 = vmatprep.mubr.bf16.mxu0 %v92
  %320 = vmatmul.mubr.bf16.gmra.mxu0 %v91
  %v321 = vpop.f32.mrf.mxu0
  %v322 = vadd.f32 0.0, %v321
  %v323 = vpop.f32.mrf.mxu0
  %v324 = vpop.f32.mrf.mxu0
  %v325 = vadd.f32 0.0, %v324
  %v326 = vpop.f32.mrf.mxu0
  %327 = vmatprep.mubr.bf16.mxu0 %v94
  %328 = vmatmul.mubr.bf16.gmra.mxu0 %v93
  %v329 = vpop.f32.mrf.mxu0
  %v330 = vadd.f32 0.0, %v329
  %v331 = vpop.f32.mrf.mxu0
  %v332 = vpop.f32.mrf.mxu0
  %v333 = vadd.f32 0.0, %v332
  %v334 = vpop.f32.mrf.mxu0
  %335 = vmatprep.mubr.bf16.mxu0 %v96
  %336 = vmatmul.mubr.bf16.gmra.mxu0 %v95
  %v337 = vpop.f32.mrf.mxu0
  %v338 = vadd.f32 0.0, %v337
  %v339 = vpop.f32.mrf.mxu0
  %v340 = vpop.f32.mrf.mxu0
  %v341 = vadd.f32 0.0, %v340
  %v342 = vpop.f32.mrf.mxu0
  %343 = vmatprep.mubr.bf16.mxu0 %v98
  %344 = vmatmul.mubr.bf16.gmra.mxu0 %v97
  %v345 = vpop.f32.mrf.mxu0
  %v346 = vadd.f32 0.0, %v345
  %v347 = vpop.f32.mrf.mxu0
  %v348 = vpop.f32.mrf.mxu0
  %v349 = vadd.f32 0.0, %v348
  %v350 = vpop.f32.mrf.mxu0
  %351 = vmatprep.mubr.bf16.mxu0 %v100
  %352 = vmatmul.mubr.bf16.gmra.mxu0 %v99
  %v353 = vpop.f32.mrf.mxu0
  %v354 = vadd.f32 0.0, %v353
  %v355 = vpop.f32.mrf.mxu0
  %v356 = vpop.f32.mrf.mxu0
  %v357 = vadd.f32 0.0, %v356
  %v358 = vpop.f32.mrf.mxu0
  %359 = vmatprep.mubr.bf16.mxu0 %v102
  %360 = vmatmul.mubr.bf16.gmra.mxu0 %v101
  %v361 = vpop.f32.mrf.mxu0
  %v362 = vadd.f32 0.0, %v361
  %v363 = vpop.f32.mrf.mxu0
  %v364 = vpop.f32.mrf.mxu0
  %v365 = vadd.f32 0.0, %v364
  %v366 = vpop.f32.mrf.mxu0
  %367 = vmatprep.mubr.bf16.mxu0 %v104
  %368 = vmatmul.mubr.bf16.gmra.mxu0 %v103
  %v369 = vpop.f32.mrf.mxu0
  %v370 = vadd.f32 0.0, %v369
  %v371 = vpop.f32.mrf.mxu0
  %v372 = vpop.f32.mrf.mxu0
  %v373 = vadd.f32 0.0, %v372
  %v374 = vpop.f32.mrf.mxu0
  %375 = vmatprep.mubr.bf16.mxu0 %v106
  %376 = vmatmul.mubr.bf16.gmra.mxu0 %v105
  %v377 = vpop.f32.mrf.mxu0
  %v378 = vadd.f32 0.0, %v377
  %v379 = vpop.f32.mrf.mxu0
  %v380 = vpop.f32.mrf.mxu0
  %v381 = vadd.f32 0.0, %v380
  %v382 = vpop.f32.mrf.mxu0
  %383 = vmatprep.mubr.bf16.mxu0 %v108
  %384 = vmatmul.mubr.bf16.gmra.mxu0 %v107
  %v385 = vpop.f32.mrf.mxu0
  %v386 = vadd.f32 0.0, %v385
  %v387 = vpop.f32.mrf.mxu0
  %v388 = vpop.f32.mrf.mxu0
  %v389 = vadd.f32 0.0, %v388
  %v390 = vpop.f32.mrf.mxu0
  %391 = vmatprep.mubr.bf16.mxu0 %v110
  %392 = vmatmul.mubr.bf16.gmra.mxu0 %v109
  %v393 = vpop.f32.mrf.mxu0
  %v394 = vadd.f32 0.0, %v393
  %v395 = vpop.f32.mrf.mxu0
  %v396 = vpop.f32.mrf.mxu0
  %v397 = vadd.f32 0.0, %v396
  %v398 = vpop.f32.mrf.mxu0
  %399 = vdwg.mxu0
  %p400 = scmp.eq.s32.totalorder 0, 0
  // Predicated region
  $region14: #{graph_convolution.3} parent=0 // pred_check
    %p401 = pneg %p400
  $region15: #{graph_convolution.3} parent=0 // pred_check_branch
    %403 = sbr.rel (%p401) target = $region17
  $region16: #{graph_convolution.3} parent=0 // pred_region
    %404 = vst [vmem:[%s3] sm:$0xff] %v274
    %405 = vst [vmem:[%s3 + $0x8] sm:$0xff] %v277
    %406 = vst [vmem:[%s3 + $0x10] sm:$0xff] %v282
    %407 = vst [vmem:[%s3 + $0x18] sm:$0xff] %v285
    %408 = vst [vmem:[%s3 + $0x20] sm:$0xff] %v290
    %409 = vst [vmem:[%s3 + $0x28] sm:$0xff] %v293
    %410 = vst [vmem:[%s3 + $0x30] sm:$0xff] %v298
    %411 = vst [vmem:[%s3 + $0x38] sm:$0xff] %v301
    %412 = vst [vmem:[%s3 + $0x40] sm:$0xff] %v306
    %413 = vst [vmem:[%s3 + $0x48] sm:$0xff] %v309
    %414 = vst [vmem:[%s3 + $0x50] sm:$0xff] %v314
    %415 = vst [vmem:[%s3 + $0x58] sm:$0xff] %v317
    %416 = vst [vmem:[%s3 + $0x60] sm:$0xff] %v322
    %417 = vst [vmem:[%s3 + $0x68] sm:$0xff] %v325
    %418 = vst [vmem:[%s3 + $0x70] sm:$0xff] %v330
    %419 = vst [vmem:[%s3 + $0x78] sm:$0xff] %v333
    %420 = vst [vmem:[%s3 + $0x80] sm:$0xff] %v338
    %421 = vst [vmem:[%s3 + $0x88] sm:$0xff] %v341
    %422 = vst [vmem:[%s3 + $0x90] sm:$0xff] %v346
    %423 = vst [vmem:[%s3 + $0x98] sm:$0xff] %v349
    %424 = vst [vmem:[%s3 + $0xa0] sm:$0xff] %v354
    %425 = vst [vmem:[%s3 + $0xa8] sm:$0xff] %v357
    %426 = vst [vmem:[%s3 + $0xb0] sm:$0xff] %v362
    %427 = vst [vmem:[%s3 + $0xb8] sm:$0xff] %v365
    %428 = vst [vmem:[%s3 + $0xc0] sm:$0xff] %v370
    %429 = vst [vmem:[%s3 + $0xc8] sm:$0xff] %v373
    %430 = vst [vmem:[%s3 + $0xd0] sm:$0xff] %v378
    %431 = vst [vmem:[%s3 + $0xd8] sm:$0xff] %v381
    %432 = vst [vmem:[%s3 + $0xe0] sm:$0xff] %v386
    %433 = vst [vmem:[%s3 + $0xe8] sm:$0xff] %v389
    %434 = vst [vmem:[%s3 + $0xf0] sm:$0xff] %v394
    %435 = vst [vmem:[%s3 + $0xf8] sm:$0xff] %v397
  $region17: #{graph_convolution.3} parent=0 // pred_fallthru
    _
  %p436 = scmp.gt.s32.totalorder 0, 0
  // Predicated region
  $region18: #{graph_convolution.3} parent=0 // pred_check
    %p437 = pneg %p436
  $region19: #{graph_convolution.3} parent=0 // pred_check_branch
    %439 = sbr.rel (%p437) target = $region21
  $region20: #{graph_convolution.3} parent=0 // pred_region
    %v440 = vld [vmem:[%s3] sm:$0xff]
    %v441 = vld [vmem:[%s3 + $0x8] sm:$0xff]
    %v442 = vld [vmem:[%s3 + $0x10] sm:$0xff]
    %v443 = vld [vmem:[%s3 + $0x18] sm:$0xff]
    %v444 = vld [vmem:[%s3 + $0x20] sm:$0xff]
    %v445 = vld [vmem:[%s3 + $0x28] sm:$0xff]
    %v446 = vld [vmem:[%s3 + $0x30] sm:$0xff]
    %v447 = vld [vmem:[%s3 + $0x38] sm:$0xff]
    %v448 = vld [vmem:[%s3 + $0x40] sm:$0xff]
    %v449 = vld [vmem:[%s3 + $0x48] sm:$0xff]
    %v450 = vld [vmem:[%s3 + $0x50] sm:$0xff]
    %v451 = vld [vmem:[%s3 + $0x58] sm:$0xff]
    %v452 = vld [vmem:[%s3 + $0x60] sm:$0xff]
    %v453 = vld [vmem:[%s3 + $0x68] sm:$0xff]
    %v454 = vld [vmem:[%s3 + $0x70] sm:$0xff]
    %v455 = vld [vmem:[%s3 + $0x78] sm:$0xff]
    %v456 = vld [vmem:[%s3 + $0x80] sm:$0xff]
    %v457 = vld [vmem:[%s3 + $0x88] sm:$0xff]
    %v458 = vld [vmem:[%s3 + $0x90] sm:$0xff]
    %v459 = vld [vmem:[%s3 + $0x98] sm:$0xff]
    %v460 = vld [vmem:[%s3 + $0xa0] sm:$0xff]
    %v461 = vld [vmem:[%s3 + $0xa8] sm:$0xff]
    %v462 = vld [vmem:[%s3 + $0xb0] sm:$0xff]
    %v463 = vld [vmem:[%s3 + $0xb8] sm:$0xff]
    %v464 = vld [vmem:[%s3 + $0xc0] sm:$0xff]
    %v465 = vld [vmem:[%s3 + $0xc8] sm:$0xff]
    %v466 = vld [vmem:[%s3 + $0xd0] sm:$0xff]
    %v467 = vld [vmem:[%s3 + $0xd8] sm:$0xff]
    %v468 = vld [vmem:[%s3 + $0xe0] sm:$0xff]
    %v469 = vld [vmem:[%s3 + $0xe8] sm:$0xff]
    %v470 = vld [vmem:[%s3 + $0xf0] sm:$0xff]
    %v471 = vld [vmem:[%s3 + $0xf8] sm:$0xff]
    %v472 = vadd.f32 %v440, %v274
    %v473 = vadd.f32 %v441, %v277
    %v474 = vadd.f32 %v442, %v282
    %v475 = vadd.f32 %v443, %v285
    %v476 = vadd.f32 %v444, %v290
    %v477 = vadd.f32 %v445, %v293
    %v478 = vadd.f32 %v446, %v298
    %v479 = vadd.f32 %v447, %v301
    %v480 = vadd.f32 %v448, %v306
    %v481 = vadd.f32 %v449, %v309
    %v482 = vadd.f32 %v450, %v314
    %v483 = vadd.f32 %v451, %v317
    %v484 = vadd.f32 %v452, %v322
    %v485 = vadd.f32 %v453, %v325
    %v486 = vadd.f32 %v454, %v330
    %v487 = vadd.f32 %v455, %v333
    %v488 = vadd.f32 %v456, %v338
    %v489 = vadd.f32 %v457, %v341
    %v490 = vadd.f32 %v458, %v346
    %v491 = vadd.f32 %v459, %v349
    %v492 = vadd.f32 %v460, %v354
    %v493 = vadd.f32 %v461, %v357
    %v494 = vadd.f32 %v462, %v362
    %v495 = vadd.f32 %v463, %v365
    %v496 = vadd.f32 %v464, %v370
    %v497 = vadd.f32 %v465, %v373
    %v498 = vadd.f32 %v466, %v378
    %v499 = vadd.f32 %v467, %v381
    %v500 = vadd.f32 %v468, %v386
    %v501 = vadd.f32 %v469, %v389
    %v502 = vadd.f32 %v470, %v394
    %v503 = vadd.f32 %v471, %v397
    %504 = vst [vmem:[%s3] sm:$0xff] %v472
    %505 = vst [vmem:[%s3 + $0x8] sm:$0xff] %v473
    %506 = vst [vmem:[%s3 + $0x10] sm:$0xff] %v474
    %507 = vst [vmem:[%s3 + $0x18] sm:$0xff] %v475
    %508 = vst [vmem:[%s3 + $0x20] sm:$0xff] %v476
    %509 = vst [vmem:[%s3 + $0x28] sm:$0xff] %v477
    %510 = vst [vmem:[%s3 + $0x30] sm:$0xff] %v478
    %511 = vst [vmem:[%s3 + $0x38] sm:$0xff] %v479
    %512 = vst [vmem:[%s3 + $0x40] sm:$0xff] %v480
    %513 = vst [vmem:[%s3 + $0x48] sm:$0xff] %v481
    %514 = vst [vmem:[%s3 + $0x50] sm:$0xff] %v482
    %515 = vst [vmem:[%s3 + $0x58] sm:$0xff] %v483
    %516 = vst [vmem:[%s3 + $0x60] sm:$0xff] %v484
    %517 = vst [vmem:[%s3 + $0x68] sm:$0xff] %v485
    %518 = vst [vmem:[%s3 + $0x70] sm:$0xff] %v486
    %519 = vst [vmem:[%s3 + $0x78] sm:$0xff] %v487
    %520 = vst [vmem:[%s3 + $0x80] sm:$0xff] %v488
    %521 = vst [vmem:[%s3 + $0x88] sm:$0xff] %v489
    %522 = vst [vmem:[%s3 + $0x90] sm:$0xff] %v490
    %523 = vst [vmem:[%s3 + $0x98] sm:$0xff] %v491
    %524 = vst [vmem:[%s3 + $0xa0] sm:$0xff] %v492
    %525 = vst [vmem:[%s3 + $0xa8] sm:$0xff] %v493
    %526 = vst [vmem:[%s3 + $0xb0] sm:$0xff] %v494
    %527 = vst [vmem:[%s3 + $0xb8] sm:$0xff] %v495
    %528 = vst [vmem:[%s3 + $0xc0] sm:$0xff] %v496
    %529 = vst [vmem:[%s3 + $0xc8] sm:$0xff] %v497
    %530 = vst [vmem:[%s3 + $0xd0] sm:$0xff] %v498
    %531 = vst [vmem:[%s3 + $0xd8] sm:$0xff] %v499
    %532 = vst [vmem:[%s3 + $0xe0] sm:$0xff] %v500
    %533 = vst [vmem:[%s3 + $0xe8] sm:$0xff] %v501
    %534 = vst [vmem:[%s3 + $0xf0] sm:$0xff] %v502
    %535 = vst [vmem:[%s3 + $0xf8] sm:$0xff] %v503
  $region21: #{graph_convolution.3} parent=0 // pred_fallthru
    _
  // Predicated region
  $region22: #{graph_convolution.3} parent=0 // pred_check
    %p536 = pneg %p400
  $region23: #{graph_convolution.3} parent=0 // pred_check_branch
    %538 = sbr.rel (%p536) target = $region25
  $region24: #{graph_convolution.3} parent=0 // pred_region
    %v539 = vld [vmem:[%s3] sm:$0xff]
    %v540 = vld [vmem:[%s3 + $0x8] sm:$0xff]
    %v541 = vld [vmem:[%s3 + $0x10] sm:$0xff]
    %v542 = vld [vmem:[%s3 + $0x18] sm:$0xff]
    %v543 = vld [vmem:[%s3 + $0x20] sm:$0xff]
    %v544 = vld [vmem:[%s3 + $0x28] sm:$0xff]
    %v545 = vld [vmem:[%s3 + $0x30] sm:$0xff]
    %v546 = vld [vmem:[%s3 + $0x38] sm:$0xff]
    %v547 = vld [vmem:[%s3 + $0x40] sm:$0xff]
    %v548 = vld [vmem:[%s3 + $0x48] sm:$0xff]
    %v549 = vld [vmem:[%s3 + $0x50] sm:$0xff]
    %v550 = vld [vmem:[%s3 + $0x58] sm:$0xff]
    %v551 = vld [vmem:[%s3 + $0x60] sm:$0xff]
    %v552 = vld [vmem:[%s3 + $0x68] sm:$0xff]
    %v553 = vld [vmem:[%s3 + $0x70] sm:$0xff]
    %v554 = vld [vmem:[%s3 + $0x78] sm:$0xff]
    %v555 = vld [vmem:[%s3 + $0x80] sm:$0xff]
    %v556 = vld [vmem:[%s3 + $0x88] sm:$0xff]
    %v557 = vld [vmem:[%s3 + $0x90] sm:$0xff]
    %v558 = vld [vmem:[%s3 + $0x98] sm:$0xff]
    %v559 = vld [vmem:[%s3 + $0xa0] sm:$0xff]
    %v560 = vld [vmem:[%s3 + $0xa8] sm:$0xff]
    %v561 = vld [vmem:[%s3 + $0xb0] sm:$0xff]
    %v562 = vld [vmem:[%s3 + $0xb8] sm:$0xff]
    %v563 = vld [vmem:[%s3 + $0xc0] sm:$0xff]
    %v564 = vld [vmem:[%s3 + $0xc8] sm:$0xff]
    %v565 = vld [vmem:[%s3 + $0xd0] sm:$0xff]
    %v566 = vld [vmem:[%s3 + $0xd8] sm:$0xff]
    %v567 = vld [vmem:[%s3 + $0xe0] sm:$0xff]
    %v568 = vld [vmem:[%s3 + $0xe8] sm:$0xff]
    %v569 = vld [vmem:[%s3 + $0xf0] sm:$0xff]
    %v570 = vld [vmem:[%s3 + $0xf8] sm:$0xff]
    %v571 = vld [vmem:[%s2] sm:$0x1]
    %v573 = vlaneseq
    %v574 = vshrl.u32 %v573, 7
    %v575 = vsub.s32 0, %v574
    %v576 = vrot.slane %v571, %v575
    %v578 = vadd.f32 %v539, %v576
    %v579 = vadd.f32 %v540, %v576
    %v580 = vadd.f32 %v541, %v576
    %v581 = vadd.f32 %v542, %v576
    %v582 = vadd.f32 %v543, %v576
    %v583 = vadd.f32 %v544, %v576
    %v584 = vadd.f32 %v545, %v576
    %v585 = vadd.f32 %v546, %v576
    %v586 = vadd.f32 %v547, %v576
    %v587 = vadd.f32 %v548, %v576
    %v588 = vadd.f32 %v549, %v576
    %v589 = vadd.f32 %v550, %v576
    %v590 = vadd.f32 %v551, %v576
    %v591 = vadd.f32 %v552, %v576
    %v592 = vadd.f32 %v553, %v576
    %v593 = vadd.f32 %v554, %v576
    %v594 = vadd.f32 %v555, %v576
    %v595 = vadd.f32 %v556, %v576
    %v596 = vadd.f32 %v557, %v576
    %v597 = vadd.f32 %v558, %v576
    %v598 = vadd.f32 %v559, %v576
    %v599 = vadd.f32 %v560, %v576
    %v600 = vadd.f32 %v561, %v576
    %v601 = vadd.f32 %v562, %v576
    %v602 = vadd.f32 %v563, %v576
    %v603 = vadd.f32 %v564, %v576
    %v604 = vadd.f32 %v565, %v576
    %v605 = vadd.f32 %v566, %v576
    %v606 = vadd.f32 %v567, %v576
    %v607 = vadd.f32 %v568, %v576
    %v608 = vadd.f32 %v569, %v576
    %v609 = vadd.f32 %v570, %v576
    %610 = vst [vmem:[%s3] sm:$0xff] %v578
    %611 = vst [vmem:[%s3 + $0x8] sm:$0xff] %v579
    %612 = vst [vmem:[%s3 + $0x10] sm:$0xff] %v580
    %613 = vst [vmem:[%s3 + $0x18] sm:$0xff] %v581
    %614 = vst [vmem:[%s3 + $0x20] sm:$0xff] %v582
    %615 = vst [vmem:[%s3 + $0x28] sm:$0xff] %v583
    %616 = vst [vmem:[%s3 + $0x30] sm:$0xff] %v584
    %617 = vst [vmem:[%s3 + $0x38] sm:$0xff] %v585
    %618 = vst [vmem:[%s3 + $0x40] sm:$0xff] %v586
    %619 = vst [vmem:[%s3 + $0x48] sm:$0xff] %v587
    %620 = vst [vmem:[%s3 + $0x50] sm:$0xff] %v588
    %621 = vst [vmem:[%s3 + $0x58] sm:$0xff] %v589
    %622 = vst [vmem:[%s3 + $0x60] sm:$0xff] %v590
    %623 = vst [vmem:[%s3 + $0x68] sm:$0xff] %v591
    %624 = vst [vmem:[%s3 + $0x70] sm:$0xff] %v592
    %625 = vst [vmem:[%s3 + $0x78] sm:$0xff] %v593
    %626 = vst [vmem:[%s3 + $0x80] sm:$0xff] %v594
    %627 = vst [vmem:[%s3 + $0x88] sm:$0xff] %v595
    %628 = vst [vmem:[%s3 + $0x90] sm:$0xff] %v596
    %629 = vst [vmem:[%s3 + $0x98] sm:$0xff] %v597
    %630 = vst [vmem:[%s3 + $0xa0] sm:$0xff] %v598
    %631 = vst [vmem:[%s3 + $0xa8] sm:$0xff] %v599
    %632 = vst [vmem:[%s3 + $0xb0] sm:$0xff] %v600
    %633 = vst [vmem:[%s3 + $0xb8] sm:$0xff] %v601
    %634 = vst [vmem:[%s3 + $0xc0] sm:$0xff] %v602
    %635 = vst [vmem:[%s3 + $0xc8] sm:$0xff] %v603
    %636 = vst [vmem:[%s3 + $0xd0] sm:$0xff] %v604
    %637 = vst [vmem:[%s3 + $0xd8] sm:$0xff] %v605
    %638 = vst [vmem:[%s3 + $0xe0] sm:$0xff] %v606
    %639 = vst [vmem:[%s3 + $0xe8] sm:$0xff] %v607
    %640 = vst [vmem:[%s3 + $0xf0] sm:$0xff] %v608
    %641 = vst [vmem:[%s3 + $0xf8] sm:$0xff] %v609
  $region25: #{graph_convolution.3} parent=0 // pred_fallthru
    _
  // Predicated region
  $region26: #{graph_convolution.3} parent=0 // pred_check
    _
  $region27: #{graph_convolution.3} parent=0 // pred_check_branch
    %643 = sbr.rel (0) target = $region29
  $region28: #{graph_convolution.3} parent=0 // pred_region
    _
  $region29: #{graph_convolution.3} parent=0 // pred_fallthru
    _
  // Predicated region
  $region30: #{graph_convolution.3} parent=0 // pred_check
    _
  $region31: #{graph_convolution.3} parent=0 // pred_check_branch
    %645 = sbr.rel (0) target = $region33
  $region32: #{graph_convolution.3} parent=0 // pred_region
    _
  $region33: #{graph_convolution.3} parent=0 // pred_fallthru
    _

</llo_original>
